<compile_context>
chip_gen: v7x
topology: tpu7x:2x2x1
jax: 0.10.0
libtpu: 0.0.40
codegen_flags: <defaults>
</compile_context>

<pallas_src>
import math

import jax
import jax.numpy as jnp
from jax.experimental import pallas as pl
from jax.experimental.pallas import tpu as pltpu

LN_EPS = 1e-5


def ffn_sublayer_kernel(x_ref, w1_ref, b1_ref, w2_ref, b2_ref,
                        gamma_ref, beta_ref, o_ref):
    """Grid = (row tiles, F chunks). o_ref doubles as the f32 accumulator."""
    k = pl.program_id(1)

    # ---- FFN partial: relu(x @ W1_k + b1_k) @ W2_k   (bf16 MXU, f32 accum) ----
    xb = x_ref[...].astype(jnp.bfloat16)                        # (R, H) bf16
    h = jnp.dot(xb, w1_ref[...], preferred_element_type=jnp.float32)
    h = jnp.maximum(h + b1_ref[...], 0.0)                       # (R, Fk) f32
    part = jnp.dot(h.astype(jnp.bfloat16), w2_ref[...],
                   preferred_element_type=jnp.float32)          # (R, H) f32

    @pl.when(k == 0)
    def _first():
        o_ref[...] = part                                       # no zero+add pass

    @pl.when(k > 0)
    def _accum():
        o_ref[...] += part

    # ---- residual + LayerNorm (two-pass variance), last chunk only ----
    @pl.when(k == pl.num_programs(1) - 1)
    def _finalize():
        z = x_ref[...] + o_ref[...] + b2_ref[...]               # (R, H) f32
        mean = jnp.mean(z, axis=-1, keepdims=True)
        cz = z - mean
        var = jnp.mean(cz * cz, axis=-1, keepdims=True)         # (z-mean)^2: no cancellation
        scale = gamma_ref[...] * jax.lax.rsqrt(var + LN_EPS)    # gamma folded into scale
        o_ref[...] = cz * scale + beta_ref[...]


# ----------------------------- tiling helpers -----------------------------

def _round_up(a, b):
    return -(-a // b) * b


def _cdiv(a, b):
    return -(-a // b)


def _vmem_budget():
    """Per-generation VMEM budget with headroom for Mosaic internal scratch."""
    cap = 64 * 1024 * 1024                       # conservative (v7x) default
    try:
        info = pltpu.get_tpu_info()
        c = int(getattr(info, "vmem_capacity_bytes", cap))
        if c > 0:
            cap = c
    except Exception:
        pass
    return int(cap * 0.80)                       # ~51 MiB on v7x, ~102 MiB on v5e/v6e


def _footprint(tile_r, tile_f, H):
    """Conservative VMEM footprint: double-buffered tiles + in-kernel temporaries."""
    io = 2 * 2 * tile_r * H * 4                  # x + out tiles, 2 bufs each, f32
    w = 2 * 2 * (H * tile_f) * 2                 # w1 + w2 chunks, 2 bufs each, bf16
    small = 2 * 2 * (tile_f + 3 * H) * 4         # b1 / b2 / gamma / beta (generous)
    inter = tile_r * tile_f * (4 + 2)            # h f32 + bf16 copy for 2nd matmul
    inter += tile_r * H * (2 + 4 + 4)            # xb bf16, partial f32, z f32
    return io + w + small + inter


def _select_tiles(R, H, F, budget):
    """Pick (TILE_R, TILE_F).  Prefer fully VMEM-resident weights (TILE_F=F);
    otherwise the largest row tile (arithmetic intensity on the weight stream),
    then the largest 128-aligned F chunk that fits."""
    # Row tiles: MXU-aligned; capped so the parallel row axis has >= 2 tiles.
    cap = _round_up(_cdiv(R, 2), 8) if R > 8 else _round_up(max(R, 1), 8)
    row_cands = [t for t in (1024, 768, 512, 256, 128, 64, 32, 16, 8) if t <= cap]
    if not row_cands:
        row_cands = [8]

    # 1) Weights fully resident: zero weight re-streaming across row tiles.
    for tr in row_cands:
        if _footprint(tr, F, H) <= budget:
            return tr, F

    # 2) Chunked F: TILE_R first (sets FLOPs/weight-byte), then TILE_F.
    f_cands = [f for f in (2048, 1024, 512, 256, 128) if f < F]
    if not f_cands:
        f_cands = [F]
    for tr in row_cands:
        for tf in f_cands:
            if _footprint(tr, tf, H) <= budget:
                return tr, tf
    return row_cands[-1], f_cands[-1]            # last resort


# ------------------------------- wrapper ----------------------------------

def ffn_sublayer(x, w1, b1, w2, b2, gamma, beta):
    """x: (B, S, H) f32.  w1: (H, F), w2: (F, H) (transposed torch layout),
    b1: (1, F), b2/gamma/beta: (1, H). Returns (B, S, H) f32."""
    B, S, H = x.shape
    F = w1.shape[1]
    R = B * S

    budget = _vmem_budget()
    TILE_R, TILE_F = _select_tiles(R, H, F, budget)

    # ---- row (token) padding ----
    R_pad = _round_up(R, TILE_R)
    x2d = x.reshape(R, H)
    if R_pad != R:
        x2d = jnp.pad(x2d, ((0, R_pad - R), (0, 0)))

    # ---- filter (F) padding when chunked; zero-padded W1/b1/W2 contribute 0 ----
    F_pad = _round_up(F, TILE_F)
    w1b = w1.astype(jnp.bfloat16)
    w2b = w2.astype(jnp.bfloat16)
    b1p = b1
    if F_pad != F:
        w1b = jnp.pad(w1b, ((0, 0), (0, F_pad - F)))
        w2b = jnp.pad(w2b, ((0, F_pad - F), (0, 0)))
        b1p = jnp.pad(b1, ((0, 0), (0, F_pad - F)))
    num_f = F_pad // TILE_F

    grid = (R_pad // TILE_R, num_f)

    vmem_limit = int(min(max(_footprint(TILE_R, TILE_F, H) + (2 << 20),
                             16 * 1024 * 1024), budget))

    # Real HBM traffic: x read + out write once; weights once when resident,
    # re-streamed once per row tile when the F axis is chunked.
    weight_bytes = 2 * H * F_pad * 2
    weight_traffic = weight_bytes * (1 if num_f == 1 else grid[0])
    cost = pl.CostEstimate(
        flops=4 * R_pad * H * F_pad,             # two matmuls
        transcendentals=0,
        bytes_accessed=2 * R_pad * H * 4 + weight_traffic + (F_pad + 3 * H) * 4,
    )

    out2d = pl.pallas_call(
        ffn_sublayer_kernel,
        out_shape=jax.ShapeDtypeStruct((R_pad, H), jnp.float32),
        grid_spec=pltpu.PrefetchScalarGridSpec(
            num_scalar_prefetch=0,
            grid=grid,
            in_specs=[
                pl.BlockSpec((TILE_R, H), lambda i, k: (i, 0)),   # x tile (resident over k)
                pl.BlockSpec((H, TILE_F), lambda i, k: (0, k)),   # w1 chunk (constant over i)
                pl.BlockSpec((1, TILE_F), lambda i, k: (0, k)),   # b1 chunk (constant over i)
                pl.BlockSpec((TILE_F, H), lambda i, k: (k, 0)),   # w2 chunk (constant over i)
                pl.BlockSpec((1, H), lambda i, k: (0, 0)),        # b2 (resident)
                pl.BlockSpec((1, H), lambda i, k: (0, 0)),        # gamma (resident)
                pl.BlockSpec((1, H), lambda i, k: (0, 0)),        # beta (resident)
            ],
            out_specs=pl.BlockSpec((TILE_R, H), lambda i, k: (i, 0)),  # accumulator
        ),
        compiler_params=pltpu.CompilerParams(
            dimension_semantics=("parallel", "arbitrary"),
            vmem_limit_bytes=vmem_limit,
        ),
        cost_estimate=cost,
    )(x2d, w1b, b1p, w2b, b2, gamma, beta)

    return out2d[:R].reshape(B, S, H)


def xavier_uniform(key, fan_out, fan_in):
    # matches torch.nn.init.xavier_uniform_ for a (fan_out, fan_in) Linear weight
    bound = math.sqrt(6.0 / (fan_in + fan_out))
    return jax.random.uniform(key, (fan_out, fan_in), jnp.float32, -bound, bound)


if __name__ == "__main__":
    # Small shapes consistent with the module: (batch, seq, hidden), filter
    B, S, H, FILT = 2, 8, 32, 64

    key = jax.random.PRNGKey(0)
    k_x, k_w1, k_w2 = jax.random.split(key, 3)

    x = jax.random.normal(k_x, (B, S, H), jnp.float32)

    # FeedForward params (torch Linear weight shape is (out, in); kernel wants transposed)
    w1_t = xavier_uniform(k_w1, FILT, H)          # (FILT, H)  torch layout
    w2_t = xavier_uniform(k_w2, H, FILT)          # (H, FILT)  torch layout
    w1 = jnp.transpose(w1_t)                      # (H, FILT)  kernel layout
    w2 = jnp.transpose(w2_t)                      # (FILT, H)  kernel layout
    b1 = jnp.zeros((1, FILT), jnp.float32)        # bias init = 0
    b2 = jnp.zeros((1, H), jnp.float32)

    # LayerNorm params (torch default: weight=1, bias=0)
    gamma = jnp.ones((1, H), jnp.float32)
    beta = jnp.zeros((1, H), jnp.float32)

    out = ffn_sublayer(x, w1, b1, w2, b2, gamma, beta)
    jax.block_until_ready(out)

    # Reference with the same bf16-matmul / f32-accumulate recipe, two-pass LN
    x2d = x.reshape(-1, H)
    w1b = w1.astype(jnp.bfloat16)
    w2b = w2.astype(jnp.bfloat16)
    h_ref = jnp.maximum(
        jnp.dot(x2d.astype(jnp.bfloat16), w1b, preferred_element_type=jnp.float32) + b1, 0.0)
    y_ref = jnp.dot(h_ref.astype(jnp.bfloat16), w2b, preferred_element_type=jnp.float32) + b2
    z_ref = x2d + y_ref
    mu = jnp.mean(z_ref, axis=-1, keepdims=True)
    var = jnp.mean((z_ref - mu) ** 2, axis=-1, keepdims=True)
    ref = ((z_ref - mu) * jax.lax.rsqrt(var + LN_EPS) * gamma + beta).reshape(B, S, H)

    assert jnp.allclose(out, ref, atol=5e-3, rtol=5e-3), float(jnp.max(jnp.abs(out - ref)))

    print("KERNEL_OK")
</pallas_src>

<mosaic_0001>
module attributes {stable_mosaic.version = 11 : i64} {
  func.func @ffn_sublayer_kernel(%arg0: i32, %arg1: i32, %arg2: memref<8x32xf32, #tpu.memory_space<vmem>>, %arg3: memref<32x64xbf16, #tpu.memory_space<vmem>>, %arg4: memref<1x64xf32, #tpu.memory_space<vmem>>, %arg5: memref<64x32xbf16, #tpu.memory_space<vmem>>, %arg6: memref<1x32xf32, #tpu.memory_space<vmem>>, %arg7: memref<1x32xf32, #tpu.memory_space<vmem>>, %arg8: memref<1x32xf32, #tpu.memory_space<vmem>>, %arg9: memref<8x32xf32, #tpu.memory_space<vmem>>) attributes {dimension_semantics = [#tpu.dimension_semantics<parallel>, #tpu.dimension_semantics<arbitrary>], iteration_bounds = array<i64: 2, 1>, scalar_prefetch = 0 : i64, scratch_operands = 0 : i64, tpu.core_type = #tpu.core_type<tc>, window_params = [{transform_indices = @transform_0, window_bounds = array<i64: 8, 32>}, {transform_indices = @transform_1, window_bounds = array<i64: 32, 64>}, {transform_indices = @transform_2, window_bounds = array<i64: 1, 64>}, {transform_indices = @transform_3, window_bounds = array<i64: 64, 32>}, {pipeline_mode = #tpu.pipeline_mode<synchronous>, transform_indices = @transform_4, window_bounds = array<i64: 1, 32>}, {pipeline_mode = #tpu.pipeline_mode<synchronous>, transform_indices = @transform_5, window_bounds = array<i64: 1, 32>}, {pipeline_mode = #tpu.pipeline_mode<synchronous>, transform_indices = @transform_6, window_bounds = array<i64: 1, 32>}, {transform_indices = @transform_7, window_bounds = array<i64: 8, 32>}]} {
    %c0 = arith.constant 0 : index
    %c0_0 = arith.constant 0 : index
    %0 = vector.load %arg2[%c0, %c0_0] : memref<8x32xf32, #tpu.memory_space<vmem>>, vector<8x32xf32>
    %1 = arith.truncf %0 : vector<8x32xf32> to vector<8x32xbf16>
    %c0_1 = arith.constant 0 : index
    %c0_2 = arith.constant 0 : index
    %2 = vector.load %arg3[%c0_1, %c0_2] : memref<32x64xbf16, #tpu.memory_space<vmem>>, vector<32x64xbf16>
    %cst = arith.constant dense<0.000000e+00> : vector<8x64xf32>
    %3 = tpu.matmul %1, %2, %cst {dimension_numbers = #tpu.dot_dimension_numbers<[1], [0], [0], [1], [0, 0, 1, 1], [], []>} : vector<8x32xbf16>, vector<32x64xbf16>, vector<8x64xf32> -> vector<8x64xf32>
    %c0_3 = arith.constant 0 : index
    %c0_4 = arith.constant 0 : index
    %4 = vector.load %arg4[%c0_3, %c0_4] : memref<1x64xf32, #tpu.memory_space<vmem>>, vector<1x64xf32>
    %5 = vector.broadcast %4 : vector<1x64xf32> to vector<8x64xf32>
    %6 = arith.addf %3, %5 : vector<8x64xf32>
    %cst_5 = arith.constant 0.000000e+00 : f32
    %7 = vector.broadcast %cst_5 : f32 to vector<8x64xf32>
    %8 = arith.maximumf %6, %7 : vector<8x64xf32>
    %9 = arith.truncf %8 : vector<8x64xf32> to vector<8x64xbf16>
    %c0_6 = arith.constant 0 : index
    %c0_7 = arith.constant 0 : index
    %10 = vector.load %arg5[%c0_6, %c0_7] : memref<64x32xbf16, #tpu.memory_space<vmem>>, vector<64x32xbf16>
    %cst_8 = arith.constant dense<0.000000e+00> : vector<8x32xf32>
    %11 = tpu.matmul %9, %10, %cst_8 {dimension_numbers = #tpu.dot_dimension_numbers<[1], [0], [0], [1], [0, 0, 1, 1], [], []>} : vector<8x64xbf16>, vector<64x32xbf16>, vector<8x32xf32> -> vector<8x32xf32>
    %c0_i32 = arith.constant 0 : i32
    %12 = arith.cmpi eq, %arg1, %c0_i32 : i32
    %13 = arith.extui %12 : i1 to i32
    %c0_i32_9 = arith.constant 0 : i32
    %14 = arith.cmpi ne, %13, %c0_i32_9 : i32
    scf.if %14 {
      %c0_14 = arith.constant 0 : index
      %c0_15 = arith.constant 0 : index
      %21 = vector.load %arg9[%c0_14, %c0_15] : memref<8x32xf32, #tpu.memory_space<vmem>>, vector<8x32xf32>
      tpu.vector_store %arg9[%c0_14, %c0_15], %11 {strides = array<i32>} : memref<8x32xf32, #tpu.memory_space<vmem>>, vector<8x32xf32>,
    } else {
    }
    %c0_i32_10 = arith.constant 0 : i32
    %15 = arith.cmpi sgt, %arg1, %c0_i32_10 : i32
    %16 = arith.extui %15 : i1 to i32
    %c0_i32_11 = arith.constant 0 : i32
    %17 = arith.cmpi ne, %16, %c0_i32_11 : i32
    scf.if %17 {
      %c0_14 = arith.constant 0 : index
      %c0_15 = arith.constant 0 : index
      %21 = vector.load %arg9[%c0_14, %c0_15] : memref<8x32xf32, #tpu.memory_space<vmem>>, vector<8x32xf32>
      %22 = arith.addf %21, %11 : vector<8x32xf32>
      %c0_16 = arith.constant 0 : index
      %c0_17 = arith.constant 0 : index
      %23 = vector.load %arg9[%c0_16, %c0_17] : memref<8x32xf32, #tpu.memory_space<vmem>>, vector<8x32xf32>
      tpu.vector_store %arg9[%c0_16, %c0_17], %22 {strides = array<i32>} : memref<8x32xf32, #tpu.memory_space<vmem>>, vector<8x32xf32>,
    } else {
    }
    %c0_i32_12 = arith.constant 0 : i32
    %18 = arith.cmpi eq, %arg1, %c0_i32_12 : i32
    %19 = arith.extui %18 : i1 to i32
    %c0_i32_13 = arith.constant 0 : i32
    %20 = arith.cmpi ne, %19, %c0_i32_13 : i32
    scf.if %20 {
      %c0_14 = arith.constant 0 : index
      %c0_15 = arith.constant 0 : index
      %21 = vector.load %arg2[%c0_14, %c0_15] : memref<8x32xf32, #tpu.memory_space<vmem>>, vector<8x32xf32>
      %c0_16 = arith.constant 0 : index
      %c0_17 = arith.constant 0 : index
      %22 = vector.load %arg9[%c0_16, %c0_17] : memref<8x32xf32, #tpu.memory_space<vmem>>, vector<8x32xf32>
      %23 = arith.addf %21, %22 : vector<8x32xf32>
      %c0_18 = arith.constant 0 : index
      %c0_19 = arith.constant 0 : index
      %24 = vector.load %arg6[%c0_18, %c0_19] : memref<1x32xf32, #tpu.memory_space<vmem>>, vector<1x32xf32>
      %25 = vector.broadcast %24 : vector<1x32xf32> to vector<8x32xf32>
      %26 = arith.addf %23, %25 : vector<8x32xf32>
      %cst_20 = arith.constant dense<0.000000e+00> : vector<8xf32>
      %27 = vector.multi_reduction <add>, %26, %cst_20 [1] : vector<8x32xf32> to vector<8xf32>
      %28 = vector.shape_cast %27 : vector<8xf32> to vector<8x1xf32>
      %cst_21 = arith.constant 3.200000e+01 : f32
      %29 = vector.broadcast %cst_21 : f32 to vector<8x1xf32>
      %30 = arith.divf %28, %29 : vector<8x1xf32>
      %31 = vector.broadcast %30 : vector<8x1xf32> to vector<8x32xf32>
      %32 = arith.subf %26, %31 : vector<8x32xf32>
      %33 = arith.mulf %32, %32 : vector<8x32xf32>
      %cst_22 = arith.constant dense<0.000000e+00> : vector<8xf32>
      %34 = vector.multi_reduction <add>, %33, %cst_22 [1] : vector<8x32xf32> to vector<8xf32>
      %35 = vector.shape_cast %34 : vector<8xf32> to vector<8x1xf32>
      %cst_23 = arith.constant 3.200000e+01 : f32
      %36 = vector.broadcast %cst_23 : f32 to vector<8x1xf32>
      %37 = arith.divf %35, %36 : vector<8x1xf32>
      %c0_24 = arith.constant 0 : index
      %c0_25 = arith.constant 0 : index
      %38 = vector.load %arg7[%c0_24, %c0_25] : memref<1x32xf32, #tpu.memory_space<vmem>>, vector<1x32xf32>
      %cst_26 = arith.constant 9.99999974E-6 : f32
      %39 = vector.broadcast %cst_26 : f32 to vector<8x1xf32>
      %40 = arith.addf %37, %39 : vector<8x1xf32>
      %41 = math.rsqrt %40 : vector<8x1xf32>
      %42 = vector.broadcast %38 : vector<1x32xf32> to vector<8x32xf32>
      %43 = vector.broadcast %41 : vector<8x1xf32> to vector<8x32xf32>
      %44 = arith.mulf %42, %43 : vector<8x32xf32>
      %45 = arith.mulf %32, %44 : vector<8x32xf32>
      %c0_27 = arith.constant 0 : index
      %c0_28 = arith.constant 0 : index
      %46 = vector.load %arg8[%c0_27, %c0_28] : memref<1x32xf32, #tpu.memory_space<vmem>>, vector<1x32xf32>
      %47 = vector.broadcast %46 : vector<1x32xf32> to vector<8x32xf32>
      %48 = arith.addf %45, %47 : vector<8x32xf32>
      %c0_29 = arith.constant 0 : index
      %c0_30 = arith.constant 0 : index
      %49 = vector.load %arg9[%c0_29, %c0_30] : memref<8x32xf32, #tpu.memory_space<vmem>>, vector<8x32xf32>
      tpu.vector_store %arg9[%c0_29, %c0_30], %48 {strides = array<i32>} : memref<8x32xf32, #tpu.memory_space<vmem>>, vector<8x32xf32>,
    } else {
    }
    return
  }
  func.func @transform_0(%arg0: i32, %arg1: i32) -> (i32, i32) {
    %c0_i32 = arith.constant 0 : i32
    %c0_i32_0 = arith.constant 0 : i32
    return %arg0, %c0_i32 : i32, i32
  }
  func.func @transform_1(%arg0: i32, %arg1: i32) -> (i32, i32) {
    %c0_i32 = arith.constant 0 : i32
    %c0_i32_0 = arith.constant 0 : i32
    return %c0_i32, %arg1 : i32, i32
  }
  func.func @transform_2(%arg0: i32, %arg1: i32) -> (i32, i32) {
    %c0_i32 = arith.constant 0 : i32
    %c0_i32_0 = arith.constant 0 : i32
    return %c0_i32, %arg1 : i32, i32
  }
  func.func @transform_3(%arg0: i32, %arg1: i32) -> (i32, i32) {
    %c0_i32 = arith.constant 0 : i32
    %c0_i32_0 = arith.constant 0 : i32
    return %arg1, %c0_i32 : i32, i32
  }
  func.func @transform_4(%arg0: i32, %arg1: i32) -> (i32, i32) {
    %c0_i32 = arith.constant 0 : i32
    %c0_i32_0 = arith.constant 0 : i32
    %c0_i32_1 = arith.constant 0 : i32
    return %c0_i32, %c0_i32_0 : i32, i32
  }
  func.func @transform_5(%arg0: i32, %arg1: i32) -> (i32, i32) {
    %c0_i32 = arith.constant 0 : i32
    %c0_i32_0 = arith.constant 0 : i32
    %c0_i32_1 = arith.constant 0 : i32
    return %c0_i32, %c0_i32_0 : i32, i32
  }
  func.func @transform_6(%arg0: i32, %arg1: i32) -> (i32, i32) {
    %c0_i32 = arith.constant 0 : i32
    %c0_i32_0 = arith.constant 0 : i32
    %c0_i32_1 = arith.constant 0 : i32
    return %c0_i32, %c0_i32_0 : i32, i32
  }
  func.func @transform_7(%arg0: i32, %arg1: i32) -> (i32, i32) {
    %c0_i32 = arith.constant 0 : i32
    %c0_i32_0 = arith.constant 0 : i32
    return %arg0, %c0_i32 : i32, i32
  }
}

</mosaic_0001>

<llo_original>
// kernel: tpu_custom_call.1
$region0: #{tpu_custom_call.1}
  #allocation0 [shape = 'u32[]', space=smem, size = 0x4, offset = 0x4, fixed_abs, tag = 'smem constant byte address 0x4 - core index']
  #allocation1 [shape = 'u32[144,128]{1,0:T(1,128)}', space=vmem, size = 0x12000, scoped, tag = 'internal scratch']
  %s0 = inlined_call_operand.vmem [shape: f32[16,32], index: 0, kind: input, shape index: {}]
  %s1 = inlined_call_operand.vmem [shape: bf16[32,64], index: 1, kind: input, shape index: {}]
  %s2 = inlined_call_operand.vmem [shape: f32[1,64], index: 2, kind: input, shape index: {}]
  %s3 = inlined_call_operand.vmem [shape: bf16[64,32], index: 3, kind: input, shape index: {}]
  %s4 = inlined_call_operand.vmem [shape: f32[1,32], index: 4, kind: input, shape index: {}]
  %s5 = inlined_call_operand.vmem [shape: f32[1,32], index: 5, kind: input, shape index: {}]
  %s6 = inlined_call_operand.vmem [shape: f32[1,32], index: 6, kind: input, shape index: {}]
  %s7 = inlined_call_operand.hbm [shape: f32[16,32], index: 7, kind: output, shape index: {}]
  %s8 = sld [smem:[#allocation0]]
  $region73: #{tpu_custom_call.1} parent=0
    _
  %s10 = ssub.s32 1, %s8
  %s11 = scalar_select 0, %s10, %s8
  $region1: #{tpu_custom_call.1} parent=0
    #allocation2 [shape = 'u8[8192]{0}', space=vmem, size = 0x2000, scoped, tag = 'output window, operand 0']
    #allocation3 [shape = 's32[2]{0}', space=sflag, size = 0x8, scoped, tag = 'scoped memory for tpu_custom_call.1']
    %12 = vsyncpa [#allocation3], 0
    %s13 = scalar_lea.sflag [#allocation3], 1
    %14 = vsyncpa %s13, 0
    loop: start=0, step=1, limit=4
    $region2: #{tpu_custom_call.1} parent=1 // loop_pre_header
      _
    $region3: #{tpu_custom_call.1} parent=1 // loop_header
      %s16 = sphi 0, %s20
      %p17 = scmp.ge.s32.totalorder %s16, 4
      %s23 = sphi 0, %s35
      %s24 = sphi 0, %s31
      %s25 = sphi 0, %s23
      %s26 = sphi 0, %s24
      %s27 = sphi 0, %s25
      %s28 = sphi 0, %s26
      %s38 = sphi 0, %s40
      %s41 = sphi 0, %s38
      %s42 = sphi 0, %s41
      %s58 = sphi 0, %s42
      %s64 = sphi 0, %s66
      %s67 = sphi 0, %s64
      %s68 = sphi 0, %s67
      %s84 = sphi 0, %s68
      %s90 = sphi 0, %s92
      %s93 = sphi 0, %s90
      %s94 = sphi 0, %s93
      %s110 = sphi 0, %s94
      %s116 = sphi 0, %s118
      %s119 = sphi 0, %s116
      %s120 = sphi 0, %s119
      %s136 = sphi 0, %s120
      %s140 = sphi 0, %s140
      %s142 = sphi 0, %s140
      %s143 = sphi 0, %s142
      %s157 = sphi 0, %s143
      %s161 = sphi 0, %s161
      %s163 = sphi 0, %s161
      %s164 = sphi 0, %s163
      %s178 = sphi 0, %s164
      %s182 = sphi 0, %s182
      %s184 = sphi 0, %s182
      %s185 = sphi 0, %s184
      %s199 = sphi 0, %s185
      %s205 = sphi 0, %s207
      %s208 = sphi 0, %s205
      %s209 = sphi 0, %s208
      %s225 = sphi 0, %s209
    $region4: #{tpu_custom_call.1} parent=1 // loop_header_branch
      %19 = sbr.rel (%p17) target = $region8
    $region5: #{tpu_custom_call.1} parent=1 // loop_body
      %s21 = ssub.s32 %s16, 1
      %s22 = ssub.s32 %s16, 2
      %s29 = sadd.s32 1, %s24
      %p30 = scmp.ge.s32.totalorder %s29, 1
      %s31 = scalar_select %p30, 0, %s29
      %s32 = sadd.s32 1, %s23
      %s33 = scalar_select %p30, %s32, %s23
      %p34 = scmp.ge.s32.totalorder %s33, 2
      %s35 = scalar_select %p34, 0, %s33
      %s36 = ssub.s32 %s23, %s35
      %p37 = scmp.eq.s32.totalorder %s36, 0
      %s39 = sadd.s32 %s38, 1
      %s40 = scalar_select %p37, %s38, %s39
      %p43 = pneg %p37
      %p44 = scmp.eq.s32.totalorder %s16, 1
      %p45 = por %p43, %p44
      %p46 = scmp.ne.s32.totalorder %s38, %s41
      %p47 = scmp.eq.s32.totalorder %s16, 0
      %p48 = por %p46, %p47
      %p49 = scmp.ne.s32.totalorder %s38, %s41
      %p50 = scmp.eq.s32.totalorder %s21, 1
      %p51 = por %p49, %p50
      %p52 = scmp.ne.s32.totalorder %s41, %s42
      %p53 = scmp.eq.s32.totalorder %s21, 0
      %p54 = por %p52, %p53
      %p55 = scmp.ne.s32.totalorder %s41, %s42
      %p56 = scmp.eq.s32.totalorder %s22, 1
      %p57 = por %p55, %p56
      %p59 = scmp.ne.s32.totalorder %s42, %s58
      %p60 = scmp.eq.s32.totalorder %s22, 0
      %p61 = por %p59, %p60
      %s62 = ssub.s32 %s24, %s31
      %p63 = scmp.eq.s32.totalorder %s62, 0
      %s65 = sadd.s32 %s64, 1
      %s66 = scalar_select %p63, %s64, %s65
      %p69 = pneg %p63
      %p70 = scmp.eq.s32.totalorder %s16, 1
      %p71 = por %p69, %p70
      %p72 = scmp.ne.s32.totalorder %s64, %s67
      %p73 = scmp.eq.s32.totalorder %s16, 0
      %p74 = por %p72, %p73
      %p75 = scmp.ne.s32.totalorder %s64, %s67
      %p76 = scmp.eq.s32.totalorder %s21, 1
      %p77 = por %p75, %p76
      %p78 = scmp.ne.s32.totalorder %s67, %s68
      %p79 = scmp.eq.s32.totalorder %s21, 0
      %p80 = por %p78, %p79
      %p81 = scmp.ne.s32.totalorder %s67, %s68
      %p82 = scmp.eq.s32.totalorder %s22, 1
      %p83 = por %p81, %p82
      %p85 = scmp.ne.s32.totalorder %s68, %s84
      %p86 = scmp.eq.s32.totalorder %s22, 0
      %p87 = por %p85, %p86
      %s88 = ssub.s32 %s24, %s31
      %p89 = scmp.eq.s32.totalorder %s88, 0
      %s91 = sadd.s32 %s90, 1
      %s92 = scalar_select %p89, %s90, %s91
      %p95 = pneg %p89
      %p96 = scmp.eq.s32.totalorder %s16, 1
      %p97 = por %p95, %p96
      %p98 = scmp.ne.s32.totalorder %s90, %s93
      %p99 = scmp.eq.s32.totalorder %s16, 0
      %p100 = por %p98, %p99
      %p101 = scmp.ne.s32.totalorder %s90, %s93
      %p102 = scmp.eq.s32.totalorder %s21, 1
      %p103 = por %p101, %p102
      %p104 = scmp.ne.s32.totalorder %s93, %s94
      %p105 = scmp.eq.s32.totalorder %s21, 0
      %p106 = por %p104, %p105
      %p107 = scmp.ne.s32.totalorder %s93, %s94
      %p108 = scmp.eq.s32.totalorder %s22, 1
      %p109 = por %p107, %p108
      %p111 = scmp.ne.s32.totalorder %s94, %s110
      %p112 = scmp.eq.s32.totalorder %s22, 0
      %p113 = por %p111, %p112
      %s114 = ssub.s32 %s24, %s31
      %p115 = scmp.eq.s32.totalorder %s114, 0
      %s117 = sadd.s32 %s116, 1
      %s118 = scalar_select %p115, %s116, %s117
      %p121 = pneg %p115
      %p122 = scmp.eq.s32.totalorder %s16, 1
      %p123 = por %p121, %p122
      %p124 = scmp.ne.s32.totalorder %s116, %s119
      %p125 = scmp.eq.s32.totalorder %s16, 0
      %p126 = por %p124, %p125
      %p127 = scmp.ne.s32.totalorder %s116, %s119
      %p128 = scmp.eq.s32.totalorder %s21, 1
      %p129 = por %p127, %p128
      %p130 = scmp.ne.s32.totalorder %s119, %s120
      %p131 = scmp.eq.s32.totalorder %s21, 0
      %p132 = por %p130, %p131
      %p133 = scmp.ne.s32.totalorder %s119, %s120
      %p134 = scmp.eq.s32.totalorder %s22, 1
      %p135 = por %p133, %p134
      %p137 = scmp.ne.s32.totalorder %s120, %s136
      %p138 = scmp.eq.s32.totalorder %s22, 0
      %p139 = por %p137, %p138
      %s141 = sadd.s32 %s140, 1
      %p144 = scmp.eq.s32.totalorder %s16, 1
      %p145 = scmp.ne.s32.totalorder %s140, %s142
      %p146 = scmp.eq.s32.totalorder %s16, 0
      %p147 = por %p145, %p146
      %p148 = scmp.ne.s32.totalorder %s140, %s142
      %p149 = scmp.eq.s32.totalorder %s21, 1
      %p150 = por %p148, %p149
      %p151 = scmp.ne.s32.totalorder %s142, %s143
      %p152 = scmp.eq.s32.totalorder %s21, 0
      %p153 = por %p151, %p152
      %p154 = scmp.ne.s32.totalorder %s142, %s143
      %p155 = scmp.eq.s32.totalorder %s22, 1
      %p156 = por %p154, %p155
      %p158 = scmp.ne.s32.totalorder %s143, %s157
      %p159 = scmp.eq.s32.totalorder %s22, 0
      %p160 = por %p158, %p159
      %s162 = sadd.s32 %s161, 1
      %p165 = scmp.eq.s32.totalorder %s16, 1
      %p166 = scmp.ne.s32.totalorder %s161, %s163
      %p167 = scmp.eq.s32.totalorder %s16, 0
      %p168 = por %p166, %p167
      %p169 = scmp.ne.s32.totalorder %s161, %s163
      %p170 = scmp.eq.s32.totalorder %s21, 1
      %p171 = por %p169, %p170
      %p172 = scmp.ne.s32.totalorder %s163, %s164
      %p173 = scmp.eq.s32.totalorder %s21, 0
      %p174 = por %p172, %p173
      %p175 = scmp.ne.s32.totalorder %s163, %s164
      %p176 = scmp.eq.s32.totalorder %s22, 1
      %p177 = por %p175, %p176
      %p179 = scmp.ne.s32.totalorder %s164, %s178
      %p180 = scmp.eq.s32.totalorder %s22, 0
      %p181 = por %p179, %p180
      %s183 = sadd.s32 %s182, 1
      %p186 = scmp.eq.s32.totalorder %s16, 1
      %p187 = scmp.ne.s32.totalorder %s182, %s184
      %p188 = scmp.eq.s32.totalorder %s16, 0
      %p189 = por %p187, %p188
      %p190 = scmp.ne.s32.totalorder %s182, %s184
      %p191 = scmp.eq.s32.totalorder %s21, 1
      %p192 = por %p190, %p191
      %p193 = scmp.ne.s32.totalorder %s184, %s185
      %p194 = scmp.eq.s32.totalorder %s21, 0
      %p195 = por %p193, %p194
      %p196 = scmp.ne.s32.totalorder %s184, %s185
      %p197 = scmp.eq.s32.totalorder %s22, 1
      %p198 = por %p196, %p197
      %p200 = scmp.ne.s32.totalorder %s185, %s199
      %p201 = scmp.eq.s32.totalorder %s22, 0
      %p202 = por %p200, %p201
      %s203 = ssub.s32 %s23, %s35
      %p204 = scmp.eq.s32.totalorder %s203, 0
      %s206 = sadd.s32 %s205, 1
      %s207 = scalar_select %p204, %s205, %s206
      %p210 = pneg %p204
      %p211 = scmp.eq.s32.totalorder %s16, 1
      %p212 = por %p210, %p211
      %p213 = scmp.ne.s32.totalorder %s205, %s208
      %p214 = scmp.eq.s32.totalorder %s16, 0
      %p215 = por %p213, %p214
      %p216 = scmp.ne.s32.totalorder %s205, %s208
      %p217 = scmp.eq.s32.totalorder %s21, 1
      %p218 = por %p216, %p217
      %p219 = scmp.ne.s32.totalorder %s208, %s209
      %p220 = scmp.eq.s32.totalorder %s21, 0
      %p221 = por %p219, %p220
      %p222 = scmp.ne.s32.totalorder %s208, %s209
      %p223 = scmp.eq.s32.totalorder %s22, 1
      %p224 = por %p222, %p223
      %p226 = scmp.ne.s32.totalorder %s209, %s225
      %p227 = scmp.eq.s32.totalorder %s22, 0
      %p228 = por %p226, %p227
      %p229 = scmp.le.s32.totalorder 1, %s16
      %p230 = scmp.lt.s32.totalorder %s16, 3
      %p231 = pnand %p229, %p230
      %p232 = pneg %p231
      // Predicated region
      $region9: #{tpu_custom_call.1} parent=5 // pred_check
        _
      $region10: #{tpu_custom_call.1} parent=5 // pred_check_branch
        %234 = sbr.rel (%p231) target = $region12
      $region11: #{tpu_custom_call.1} parent=5 // pred_region
        %s235 = ssub.s32 %s16, 1
        // Predicated region
        $region13: #{tpu_custom_call.1} parent=11 // pred_check
          %p236 = pneg %p80
        $region14: #{tpu_custom_call.1} parent=11 // pred_check_branch
          %238 = sbr.rel (%p236) target = $region16
        $region15: #{tpu_custom_call.1} parent=11 // pred_region
          %p239 = scmp.lt.s32.totalorder %s26, 0
          %s240 = scalar_select %p239, %s26, 0
          %s241 = smul.addr %s240, 4
          %s242 = scalar_lea.vmem %s1, %s241
        $region16: #{tpu_custom_call.1} parent=11 // pred_fallthru
          _
        // Predicated region
        $region17: #{tpu_custom_call.1} parent=11 // pred_check
          %p243 = pneg %p106
        $region18: #{tpu_custom_call.1} parent=11 // pred_check_branch
          %245 = sbr.rel (%p243) target = $region20
        $region19: #{tpu_custom_call.1} parent=11 // pred_region
          %p246 = scmp.lt.s32.totalorder %s26, 0
          %s247 = scalar_select %p246, %s26, 0
          %s248 = scalar_lea.vmem %s2, %s247
        $region20: #{tpu_custom_call.1} parent=11 // pred_fallthru
          _
        // Predicated region
        $region21: #{tpu_custom_call.1} parent=11 // pred_check
          %p249 = pneg %p132
        $region22: #{tpu_custom_call.1} parent=11 // pred_check_branch
          %251 = sbr.rel (%p249) target = $region24
        $region23: #{tpu_custom_call.1} parent=11 // pred_region
          %s252 = smul.u32 8, %s26
          %p253 = scmp.lt.s32.totalorder %s252, 7
          %s254 = scalar_select %p253, %s252, 7
          %s255 = smul.addr %s254, 4
          %s256 = scalar_lea.vmem %s3, %s255
          %s257 = smul.u32 8, %s26
        $region24: #{tpu_custom_call.1} parent=11 // pred_fallthru
          _
        // Predicated region
        $region25: #{tpu_custom_call.1} parent=11 // pred_check
          %p258 = pneg %p153
        $region26: #{tpu_custom_call.1} parent=11 // pred_check_branch
          %260 = sbr.rel (%p258) target = $region28
        $region27: #{tpu_custom_call.1} parent=11 // pred_region
          _
        $region28: #{tpu_custom_call.1} parent=11 // pred_fallthru
          _
        // Predicated region
        $region29: #{tpu_custom_call.1} parent=11 // pred_check
          %p261 = pneg %p174
        $region30: #{tpu_custom_call.1} parent=11 // pred_check_branch
          %263 = sbr.rel (%p261) target = $region32
        $region31: #{tpu_custom_call.1} parent=11 // pred_region
          _
        $region32: #{tpu_custom_call.1} parent=11 // pred_fallthru
          _
        // Predicated region
        $region33: #{tpu_custom_call.1} parent=11 // pred_check
          %p264 = pneg %p195
        $region34: #{tpu_custom_call.1} parent=11 // pred_check_branch
          %266 = sbr.rel (%p264) target = $region36
        $region35: #{tpu_custom_call.1} parent=11 // pred_region
          _
        $region36: #{tpu_custom_call.1} parent=11 // pred_fallthru
          _
      $region12: #{tpu_custom_call.1} parent=5 // pred_fallthru
        _
      %p267 = scmp.lt.s32.totalorder %s16, 2
      // Predicated region
      $region37: #{tpu_custom_call.1} parent=5 // pred_check
        %p268 = pneg %p267
      $region38: #{tpu_custom_call.1} parent=5 // pred_check_branch
        %270 = sbr.rel (%p268) target = $region40
      $region39: #{tpu_custom_call.1} parent=5 // pred_region
        // Predicated region
        $region41: #{tpu_custom_call.1} parent=39 // pred_check
          %p271 = pneg %p48
        $region42: #{tpu_custom_call.1} parent=39 // pred_check_branch
          %273 = sbr.rel (%p271) target = $region44
        $region43: #{tpu_custom_call.1} parent=39 // pred_region
          %p274 = scmp.lt.s32.totalorder %s23, 1
          %s275 = scalar_select %p274, %s23, 1
          %s276 = smul.addr %s275, 8
          %s277 = scalar_lea.vmem %s0, %s276
        $region44: #{tpu_custom_call.1} parent=39 // pred_fallthru
          _
      $region40: #{tpu_custom_call.1} parent=5 // pred_fallthru
        _
      %p278 = scmp.le.s32.totalorder 1, %s16
      %p279 = scmp.lt.s32.totalorder %s16, 3
      %p280 = pnand %p278, %p279
      %p281 = pneg %p280
      // Predicated region
      $region45: #{tpu_custom_call.1} parent=5 // pred_check
        _
      $region46: #{tpu_custom_call.1} parent=5 // pred_check_branch
        %283 = sbr.rel (%p280) target = $region48
      $region47: #{tpu_custom_call.1} parent=5 // pred_region
        %s284 = ssub.s32 %s16, 1
        %p285 = scmp.lt.s32.totalorder %s25, 1
        %s286 = scalar_select %p285, %s25, 1
        %s287 = smul.addr %s286, 8
        %s288 = scalar_lea.vmem %s0, %s287
        %p289 = pneg %p54
        %p290 = pneg %p51
        %p291 = scmp.lt.s32.totalorder %s26, 0
        %s292 = scalar_select %p291, %s26, 0
        %s293 = smul.addr %s292, 4
        %s294 = scalar_lea.vmem %s1, %s293
        %p295 = pneg %p80
        %p296 = pneg %p77
        %p297 = scmp.lt.s32.totalorder %s26, 0
        %s298 = scalar_select %p297, %s26, 0
        %s299 = scalar_lea.vmem %s2, %s298
        %p300 = pneg %p106
        %p301 = pneg %p103
        %s302 = smul.u32 8, %s26
        %p303 = scmp.lt.s32.totalorder %s302, 7
        %s304 = scalar_select %p303, %s302, 7
        %s305 = smul.addr %s304, 4
        %s306 = scalar_lea.vmem %s3, %s305
        %p307 = pneg %p132
        %p308 = pneg %p129
        %p309 = pneg %p153
        %p310 = pneg %p150
        %p311 = pneg %p174
        %p312 = pneg %p171
        %p313 = pneg %p195
        %p314 = pneg %p192
        %p315 = pneg %p221
        %p316 = pneg %p218
        %s317 = sand.u32 %s208, 1
        %s318 = scalar_lea.sflag [#allocation3], %s317
        %s319 = sand.u32 %s208, 1
        %s320 = smul.addr %s319, 8
        %s321 = scalar_lea.vmem [#allocation2], %s320
        %p322 = scmp.lt.s32.totalorder %s25, 1
        %s323 = scalar_select %p322, %s25, 1
        %s324 = smul.addr %s323, 8
        %s325 = scalar_lea.vmem %s0, %s324
        %p326 = scmp.lt.s32.totalorder %s26, 0
        %s327 = scalar_select %p326, %s26, 0
        %s328 = smul.addr %s327, 4
        %s329 = scalar_lea.vmem %s1, %s328
        %p330 = scmp.lt.s32.totalorder %s26, 0
        %s331 = scalar_select %p330, %s26, 0
        %s332 = scalar_lea.vmem %s2, %s331
        %s333 = smul.u32 8, %s26
        %p334 = scmp.lt.s32.totalorder %s333, 7
        %s335 = scalar_select %p334, %s333, 7
        %s336 = smul.addr %s335, 4
        %s337 = scalar_lea.vmem %s3, %s336
        %s338 = smul.u32 8, %s26
        %v340 = vld [vmem:[%s325] sm:$0xff]
        %v341 = vpack.c.bf16 %v340, %v340
        %v342 = vld [vmem:[%s329] sm:$0xf]
        %v343 = vld [vmem:[%s329 + $0x4] sm:$0xf]
        %v344 = vld [vmem:[%s329 + $0x8] sm:$0xf]
        %v345 = vld [vmem:[%s329 + $0xc] sm:$0xf]
        %v346 = vld [vmem:[%s332] sm:$0x1]
        %v348 = vlaneseq
        %v349 = vshrl.u32 %v348, 7
        %v350 = vsub.s32 0, %v349
        %v351 = vrot.slane %v346, %v350
        %v357 = vunpack.c.l.b16 %v342
        %v358 = vunpack.c.l.b16 %v343
        %v359 = vunpack.c.l.b16 %v344
        %v360 = vunpack.c.l.b16 %v345
        %v361 = vpack.c.b16 %v358, %v357
        %v362 = vpack.c.b16 %v360, %v359
        %vm365 = vcmask 261120
        %v367 = vsel %vm365, %v341, 0
        %369 = vmatprep.subr.bf16.mxu0 0
        %370 = vmatpush1.bf16.msra.mxu0 %v361
        %371 = vmatprep.subr.bf16.mxu0 0
        %372 = vmatpush1.bf16.msra.mxu0 %v362
        %373 = vmatprep.subr.bf16.mxu0 0
        %374 = vmatpush1.bf16.msra.mxu0 0
        %375 = vmatprep.subr.bf16.mxu0 0
        %376 = vmatpush1.bf16.msra.mxu0 0
        %377 = vmatprep.subr.bf16.mxu0 0
        %378 = vmatpush1.bf16.msra.mxu0 0
        %379 = vmatprep.subr.bf16.mxu0 0
        %380 = vmatpush1.bf16.msra.mxu0 0
        %381 = vmatprep.subr.bf16.mxu0 0
        %382 = vmatpush1.bf16.msra.mxu0 0
        %383 = vmatprep.subr.bf16.mxu0 0
        %384 = vmatpush1.bf16.msra.mxu0 0
        %385 = vmatprep.subr.bf16.mxu0 0
        %386 = vmatpush1.bf16.msra.mxu0 0
        %387 = vmatprep.subr.bf16.mxu0 0
        %388 = vmatpush1.bf16.msra.mxu0 0
        %389 = vmatprep.subr.bf16.mxu0 0
        %390 = vmatpush1.bf16.msra.mxu0 0
        %391 = vmatprep.subr.bf16.mxu0 0
        %392 = vmatpush1.bf16.msra.mxu0 0
        %393 = vmatprep.subr.bf16.mxu0 0
        %394 = vmatpush1.bf16.msra.mxu0 0
        %395 = vmatprep.subr.bf16.mxu0 0
        %396 = vmatpush1.bf16.msra.mxu0 0
        %397 = vmatprep.subr.bf16.mxu0 0
        %398 = vmatpush1.bf16.msra.mxu0 0
        %399 = vmatprep.subr.bf16.mxu0 0
        %400 = vmatpush1.bf16.msra.mxu0 0
        %401 = vmatprep.mubr.bf16.mxu0 0
        %402 = vmatmul.mubr.bf16.gmra.mrb[0].mxu0 %v367
        %v403 = vpop.f32.mrb[0].mxu0
        %v404 = vadd.f32 %v351, %v403
        %v405 = vpop.f32.mrb[0].mxu0
        %v406 = vpop.f32.mrb[0].mxu0
        %v407 = vpop.f32.mrb[0].mxu0
        %408 = vdwg.mxu0
        %v409 = vmax.f32 %v404, 0.0
        %v410 = vpack.c.bf16 %v409, %v409
        %v411 = vld [vmem:[%s337] sm:$0xf]
        %v412 = vld [vmem:[%s337 + $0x4] sm:$0xf]
        %v413 = vld [vmem:[%s337 + $0x8] sm:$0xf]
        %v414 = vld [vmem:[%s337 + $0xc] sm:$0xf]
        %v415 = vld [vmem:[%s337 + $0x10] sm:$0xf]
        %v416 = vld [vmem:[%s337 + $0x14] sm:$0xf]
        %v417 = vld [vmem:[%s337 + $0x18] sm:$0xf]
        %v418 = vld [vmem:[%s337 + $0x1c] sm:$0xf]
        %v427 = vunpack.c.l.b16 %v411
        %v428 = vunpack.c.l.b16 %v412
        %v429 = vunpack.c.l.b16 %v413
        %v430 = vunpack.c.l.b16 %v414
        %v431 = vunpack.c.l.b16 %v415
        %v432 = vunpack.c.l.b16 %v416
        %v433 = vunpack.c.l.b16 %v417
        %v434 = vunpack.c.l.b16 %v418
        %v435 = vpack.c.b16 %v428, %v427
        %v436 = vpack.c.b16 %v430, %v429
        %v437 = vpack.c.b16 %v432, %v431
        %v438 = vpack.c.b16 %v434, %v433
        %vm443 = vcmask 523264
        %v445 = vsel %vm443, %v410, 0
        %447 = vmatprep.subr.bf16.mxu0 0
        %448 = vmatpush1.bf16.msra.mxu0 %v435
        %449 = vmatprep.subr.bf16.mxu0 0
        %450 = vmatpush1.bf16.msra.mxu0 %v436
        %451 = vmatprep.subr.bf16.mxu0 0
        %452 = vmatpush1.bf16.msra.mxu0 %v437
        %453 = vmatprep.subr.bf16.mxu0 0
        %454 = vmatpush1.bf16.msra.mxu0 %v438
        %455 = vmatprep.subr.bf16.mxu0 0
        %456 = vmatpush1.bf16.msra.mxu0 0
        %457 = vmatprep.subr.bf16.mxu0 0
        %458 = vmatpush1.bf16.msra.mxu0 0
        %459 = vmatprep.subr.bf16.mxu0 0
        %460 = vmatpush1.bf16.msra.mxu0 0
        %461 = vmatprep.subr.bf16.mxu0 0
        %462 = vmatpush1.bf16.msra.mxu0 0
        %463 = vmatprep.subr.bf16.mxu0 0
        %464 = vmatpush1.bf16.msra.mxu0 0
        %465 = vmatprep.subr.bf16.mxu0 0
        %466 = vmatpush1.bf16.msra.mxu0 0
        %467 = vmatprep.subr.bf16.mxu0 0
        %468 = vmatpush1.bf16.msra.mxu0 0
        %469 = vmatprep.subr.bf16.mxu0 0
        %470 = vmatpush1.bf16.msra.mxu0 0
        %471 = vmatprep.subr.bf16.mxu0 0
        %472 = vmatpush1.bf16.msra.mxu0 0
        %473 = vmatprep.subr.bf16.mxu0 0
        %474 = vmatpush1.bf16.msra.mxu0 0
        %475 = vmatprep.subr.bf16.mxu0 0
        %476 = vmatpush1.bf16.msra.mxu0 0
        %477 = vmatprep.subr.bf16.mxu0 0
        %478 = vmatpush1.bf16.msra.mxu0 0
        %479 = vmatprep.mubr.bf16.mxu0 0
        %480 = vmatmul.mubr.bf16.gmra.mrb[0].mxu0 %v445
        %v481 = vpop.f32.mrb[0].mxu0
        %v482 = vadd.f32 0.0, %v481
        %v483 = vpop.f32.mrb[0].mxu0
        %v484 = vpop.f32.mrb[0].mxu0
        %v485 = vpop.f32.mrb[0].mxu0
        %486 = vdwg.mxu0
        %p487 = scmp.eq.s32.totalorder %s26, 0
        // Predicated region
        $region49: #{tpu_custom_call.1} parent=47 // pred_check
          %p488 = pneg %p487
        $region50: #{tpu_custom_call.1} parent=47 // pred_check_branch
          %490 = sbr.rel (%p488) target = $region52
        $region51: #{tpu_custom_call.1} parent=47 // pred_region
          %491 = vst.msk [vmem:[%s321] sm:$0xff] %vm365, %v482
        $region52: #{tpu_custom_call.1} parent=47 // pred_fallthru
          _
        %p492 = scmp.gt.s32.totalorder %s26, 0
        // Predicated region
        $region53: #{tpu_custom_call.1} parent=47 // pred_check
          %p493 = pneg %p492
        $region54: #{tpu_custom_call.1} parent=47 // pred_check_branch
          %495 = sbr.rel (%p493) target = $region56
        $region55: #{tpu_custom_call.1} parent=47 // pred_region
          %v496 = vld [vmem:[%s321] sm:$0xff]
          %v497 = vadd.f32 %v496, %v482
          %498 = vst.msk [vmem:[%s321] sm:$0xff] %vm365, %v497
        $region56: #{tpu_custom_call.1} parent=47 // pred_fallthru
          _
        // Predicated region
        $region57: #{tpu_custom_call.1} parent=47 // pred_check
          %p499 = pneg %p487
        $region58: #{tpu_custom_call.1} parent=47 // pred_check_branch
          %501 = sbr.rel (%p499) target = $region60
        $region59: #{tpu_custom_call.1} parent=47 // pred_region
          %v502 = vld [vmem:[%s325] sm:$0xff]
          %v503 = vld [vmem:[%s321] sm:$0xff]
          %v504 = vadd.f32 %v502, %v503
          %v505 = vld [vmem:[%s4] sm:$0x1]
          %v507 = vlaneseq
          %v508 = vshrl.u32 %v507, 7
          %v509 = vsub.s32 0, %v508
          %v510 = vrot.slane %v505, %v509
          %v512 = vadd.f32 %v504, %v510
          %v513 = vsel %vm365, %v512, 0.0
          %514 = vadd.xlane.f32.xlu0 %v513
          %v515 = vpop.xlane.xlu0 %514
          %v516 = vrcp.pop 32.0
          %v517 = vmul.f32 %v515, %v516
          %v518 = vsub.f32 %v512, %v517
          %v519 = vmul.f32 %v518, %v518
          %v520 = vsel %vm365, %v519, 0.0
          %521 = vadd.xlane.f32.xlu0 %v520
          %v522 = vpop.xlane.xlu0 %521
          %v523 = vmul.f32 %v522, %v516
          %v524 = vld [vmem:[%s5] sm:$0x1]
          %v525 = vadd.f32 %v523, 1e-05
          %v526 = vrsqrt.pop %v525
          %v528 = vlaneseq
          %v529 = vshrl.u32 %v528, 7
          %v530 = vsub.s32 0, %v529
          %v531 = vrot.slane %v524, %v530
          %v533 = vmul.f32 %v531, %v526
          %v534 = vmul.f32 %v518, %v533
          %v535 = vld [vmem:[%s6] sm:$0x1]
          %v537 = vlaneseq
          %v538 = vshrl.u32 %v537, 7
          %v539 = vsub.s32 0, %v538
          %v540 = vrot.slane %v535, %v539
          %v542 = vadd.f32 %v534, %v540
          %543 = vst.msk [vmem:[%s321] sm:$0xff] %vm365, %v542
        $region60: #{tpu_custom_call.1} parent=47 // pred_fallthru
          _
        %s544 = sand.u32 %s208, 1
        %s545 = scalar_lea.sflag [#allocation3], %s544
        %s546 = sand.u32 %s208, 1
        %s547 = smul.addr %s546, 8
        %s548 = scalar_lea.vmem [#allocation2], %s547
        // Predicated region
        $region61: #{tpu_custom_call.1} parent=47 // pred_check
          %p549 = pneg %p218
        $region62: #{tpu_custom_call.1} parent=47 // pred_check_branch
          %551 = sbr.rel (%p549) target = $region64
        $region63: #{tpu_custom_call.1} parent=47 // pred_region
          %s553 = ssub.s32 128, 128
          %554 = vsyncadd %s545, %s553
          %s555 = smul.addr %s25, 128
          %s556 = scalar_lea.hbm %s7, %s555
          %s558 = sshll.u32 %s548, 4
          %s559 = int_to_ptr.vmem [resolvable:$true] %s558
          %561 = dma.vmem_to_hbm [thread:$0]  %s559, 128, %s556, %s545
        $region64: #{tpu_custom_call.1} parent=47 // pred_fallthru
          _
      $region48: #{tpu_custom_call.1} parent=5 // pred_fallthru
        _
      %p562 = scmp.le.s32.totalorder 2, %s16
      // Predicated region
      $region65: #{tpu_custom_call.1} parent=5 // pred_check
        %p563 = pneg %p562
      $region66: #{tpu_custom_call.1} parent=5 // pred_check_branch
        %565 = sbr.rel (%p563) target = $region68
      $region67: #{tpu_custom_call.1} parent=5 // pred_region
        %s566 = ssub.s32 %s16, 2
        // Predicated region
        $region69: #{tpu_custom_call.1} parent=67 // pred_check
          %p567 = pneg %p224
        $region70: #{tpu_custom_call.1} parent=67 // pred_check_branch
          %569 = sbr.rel (%p567) target = $region72
        $region71: #{tpu_custom_call.1} parent=67 // pred_region
          %s570 = sand.u32 %s209, 1
          %s571 = scalar_lea.sflag [#allocation3], %s570
          %s572 = sand.u32 %s209, 1
          %s573 = smul.addr %s572, 8
          %s574 = scalar_lea.vmem [#allocation2], %s573
          %575 = dma.done %s571, 128
        $region72: #{tpu_custom_call.1} parent=67 // pred_fallthru
          _
      $region68: #{tpu_custom_call.1} parent=5 // pred_fallthru
        _
    $region6: #{tpu_custom_call.1} parent=1 // loop_footer
      %s20 = sadd.s32 1, %s16
    $region7: #{tpu_custom_call.1} parent=1 // loop_footer_branch
      %15 = sbr.rel target = $region3
    $region8: #{tpu_custom_call.1} parent=1 // loop_exit
      _
    %576 = vsyncpa [#allocation3], 1
    %s577 = scalar_lea.sflag [#allocation3], 1
    %578 = vsyncpa %s577, 1

</llo_original>
